<compile_context>
chip_gen: v5e
topology: v5e:2x2
jax: 0.10.0
libtpu: 0.0.40
codegen_flags: <defaults>
</compile_context>

<pallas_src>
import jax
import jax.numpy as jnp
from jax.experimental import pallas as pl
from jax.experimental.pallas import tpu as pltpu


def _pos_emb_add_kernel(x_ref, pe_ref, o_ref):
    # x_ref : (TILE_S, B, D) block in VMEM
    # pe_ref: (TILE_S, D)    rows of the embedding table in VMEM
    # Broadcast pe over the batch axis; upcast-add-downcast so bf16 I/O also
    # accumulates in f32 (free in a mem-bound kernel; no-op for f32 inputs).
    x = x_ref[...].astype(jnp.float32)
    pe = pe_ref[...].astype(jnp.float32)
    o_ref[...] = (x + pe[:, None, :]).astype(o_ref.dtype)


def _choose_tile_s(S, B, D, itemsize, vmem_budget_bytes=16 * 1024 * 1024):
    """Largest s-tile (multiple of 8, capped at 512) whose double-buffered
    footprint (x-in + x-out + pe, 2 buffers each) fits the VMEM budget."""
    per_row = 2 * (2 * B * D + D) * itemsize  # 2 buffers x (x_in + x_out + pe)
    tile = max(1, vmem_budget_bytes // max(per_row, 1))
    # ~512 rows already saturates the HBM roofline for mem-bound adds.
    tile = min(tile, 512, S)
    if tile < S:
        tile = max(8, (tile // 8) * 8)  # keep the pe block sublane-aligned
    return tile


def positional_embedding_forward(x, emb_weight, dropout_p=0.0):
    """x: (S, B, D); emb_weight: (max_len, D).
    Returns x + emb_weight[:S][:, None, :] (dropout p=0 => identity)."""
    S, B, D = x.shape
    max_len, d_fwd = emb_weight.shape
    # The PyTorch module sets d_forwards == d_model, so the add spans all of D.
    assert d_fwd == D, "d_forwards must equal d_model (as in the PyTorch module)"
    assert S <= max_len, "sequence length exceeds max_len of the embedding table"

    tile_s = _choose_tile_s(S, B, D, x.dtype.itemsize)
    grid = (pl.cdiv(S, tile_s),)

    out = pl.pallas_call(
        _pos_emb_add_kernel,
        out_shape=jax.ShapeDtypeStruct((S, B, D), x.dtype),
        grid_spec=pltpu.PrefetchScalarGridSpec(
            num_scalar_prefetch=0,
            grid=grid,
            in_specs=[
                # x: one s-tile per grid step; (B, D) are the (sublane, lane) dims.
                pl.BlockSpec((tile_s, B, D), lambda s: (s, 0, 0)),
                # positions are arange(S): grid block s maps directly to rows
                # [s*tile_s, (s+1)*tile_s) of the embedding table (no HBM slice).
                pl.BlockSpec((tile_s, D), lambda s: (s, 0)),
            ],
            out_specs=pl.BlockSpec((tile_s, B, D), lambda s: (s, 0, 0)),
        ),
        # Every s-tile is independent -> parallel (lets v7x shard across 2 TCs).
        compiler_params=pltpu.CompilerParams(
            dimension_semantics=("parallel",),
        ),
        # Semantically an in-place `x += pe`: reuse x's HBM buffer when donated.
        input_output_aliases={0: 0},
    )(x, emb_weight)

    # Dropout with p == 0.0 is the identity (inference path of the module).
    # TODO(synk): dropout with p > 0 would use pltpu.prng_seed/prng_random_bits.
    return out


if __name__ == "__main__":
    # Small shapes consistent with the module's forward:
    #   seq_len=8, batch=2, d_model=32, max_len=64
    S, B, D, MAX_LEN = 8, 2, 32, 64

    key = jax.random.PRNGKey(0)
    kx, kw = jax.random.split(key)

    x = jax.random.normal(kx, (S, B, D), dtype=jnp.float32)
    # Deterministic "Embedding" weights (nn.Embedding default init ~ N(0,1)).
    emb_weight = jax.random.normal(kw, (MAX_LEN, D), dtype=jnp.float32)

    # Reference computed before the call (the kernel may alias/donate x's buffer).
    ref = x + emb_weight[:S][:, None, :]

    out = positional_embedding_forward(x, emb_weight)
    out = jax.block_until_ready(out)

    assert out.shape == (S, B, D)
    assert out.dtype == x.dtype
    assert jnp.allclose(out, ref, atol=1e-6), "mismatch vs reference"

    print("KERNEL_OK")
</pallas_src>

<mosaic_0001>
module attributes {stable_mosaic.version = 11 : i64} {
  func.func @_pos_emb_add_kernel(%arg0: i32, %arg1: memref<8x2x32xf32, #tpu.memory_space<vmem>>, %arg2: memref<8x32xf32, #tpu.memory_space<vmem>>, %arg3: memref<8x2x32xf32, #tpu.memory_space<vmem>>) attributes {dimension_semantics = [#tpu.dimension_semantics<parallel>], iteration_bounds = array<i64: 1>, scalar_prefetch = 0 : i64, scratch_operands = 0 : i64, tpu.core_type = #tpu.core_type<tc>, window_params = [{transform_indices = @transform_0, window_bounds = array<i64: 8, 2, 32>}, {transform_indices = @transform_1, window_bounds = array<i64: 8, 32>}, {transform_indices = @transform_2, window_bounds = array<i64: 8, 2, 32>}]} {
    %c0 = arith.constant 0 : index
    %c0_0 = arith.constant 0 : index
    %c0_1 = arith.constant 0 : index
    %0 = vector.load %arg1[%c0, %c0_0, %c0_1] : memref<8x2x32xf32, #tpu.memory_space<vmem>>, vector<8x2x32xf32>
    %c0_2 = arith.constant 0 : index
    %c0_3 = arith.constant 0 : index
    %1 = vector.load %arg2[%c0_2, %c0_3] : memref<8x32xf32, #tpu.memory_space<vmem>>, vector<8x32xf32>
    %2 = vector.shape_cast %1 : vector<8x32xf32> to vector<8x1x32xf32>
    %3 = vector.broadcast %2 : vector<8x1x32xf32> to vector<8x2x32xf32>
    %4 = arith.addf %0, %3 : vector<8x2x32xf32>
    %c0_4 = arith.constant 0 : index
    %c0_5 = arith.constant 0 : index
    %c0_6 = arith.constant 0 : index
    %5 = vector.load %arg3[%c0_4, %c0_5, %c0_6] : memref<8x2x32xf32, #tpu.memory_space<vmem>>, vector<8x2x32xf32>
    tpu.vector_store %arg3[%c0_4, %c0_5, %c0_6], %4 {strides = array<i32>} : memref<8x2x32xf32, #tpu.memory_space<vmem>>, vector<8x2x32xf32>,
    return
  }
  func.func @transform_0(%arg0: i32) -> (i32, i32, i32) {
    %c0_i32 = arith.constant 0 : i32
    %c0_i32_0 = arith.constant 0 : i32
    %c0_i32_1 = arith.constant 0 : i32
    return %arg0, %c0_i32, %c0_i32_0 : i32, i32, i32
  }
  func.func @transform_1(%arg0: i32) -> (i32, i32) {
    %c0_i32 = arith.constant 0 : i32
    %c0_i32_0 = arith.constant 0 : i32
    return %arg0, %c0_i32 : i32, i32
  }
  func.func @transform_2(%arg0: i32) -> (i32, i32, i32) {
    %c0_i32 = arith.constant 0 : i32
    %c0_i32_0 = arith.constant 0 : i32
    %c0_i32_1 = arith.constant 0 : i32
    return %arg0, %c0_i32, %c0_i32_0 : i32, i32, i32
  }
}

</mosaic_0001>

<llo_original>
// kernel: tpu_custom_call.1
$region0: #{tpu_custom_call.1}
  #allocation0 [shape = 'u32[]', space=smem, size = 0x4, offset = 0x4, fixed_abs, tag = 'smem constant byte address 0x4 - core index']
  #allocation1 [shape = 'u32[72,128]{1,0:T(1,128)}', space=vmem, size = 0x9000, scoped, tag = 'internal scratch']
  %s0 = inlined_call_operand.hbm [shape: f32[8,2,32], index: 0, kind: input, shape index: {}, may-alias: {0,2}]
  %s1 = inlined_call_operand.vmem [shape: f32[64,32], index: 1, kind: input, shape index: {}]
  %s2 = inlined_call_operand.hbm [shape: f32[8,2,32], index: 2, kind: output, shape index: {}, may-alias: {0,2}]
  %s3 = sld [smem:[#allocation0]]
  $region22: #{tpu_custom_call.1} parent=0
    _
  %s5 = ssub.s32 1, %s3
  %s6 = scalar_select 0, %s5, %s3
  $region1: #{tpu_custom_call.1} parent=0
    #allocation2 [shape = 'u8[8192]{0}', space=vmem, size = 0x2000, scoped, tag = 'input window, operand 0, single buffered']
    #allocation3 [shape = 's32[1]{0}', space=sflag, size = 0x4, scoped, tag = 'scoped memory for tpu_custom_call.1']
    #allocation4 [shape = 's32[1]{0}', space=sflag, size = 0x4, scoped, tag = 'scoped memory for tpu_custom_call.1']
    #allocation5 [shape = 'u8[8192]{0}', space=vmem, size = 0x2000, scoped, tag = 'output window, operand 0, single buffered']
    %7 = vsyncpa [#allocation3], 0
    %8 = vsyncpa [#allocation4], 0
    // Predicated region
    $region2: #{tpu_custom_call.1} parent=1 // pred_check
      _
    $region3: #{tpu_custom_call.1} parent=1 // pred_check_branch
      %10 = sbr.rel (0) target = $region5
    $region4: #{tpu_custom_call.1} parent=1 // pred_region
      %12 = vsyncadd [#allocation3], 0
      %s13 = sshll.u32 %s0, 4
      %s14 = int_to_ptr.hbm [resolvable:$true] %s13
      %s15 = sshll.u32 [#allocation2], 4
      %s16 = int_to_ptr.vmem [resolvable:$true] %s15
      %21 = dma.hbm_to_vmem [thread:$0]  %s14, 256, %s16, [#allocation3], 32, 32, 2
    $region5: #{tpu_custom_call.1} parent=1 // pred_fallthru
      _
    // Predicated region
    $region6: #{tpu_custom_call.1} parent=1 // pred_check
      _
    $region7: #{tpu_custom_call.1} parent=1 // pred_check_branch
      %23 = sbr.rel (0) target = $region9
    $region8: #{tpu_custom_call.1} parent=1 // pred_region
      _
    $region9: #{tpu_custom_call.1} parent=1 // pred_fallthru
      _
    // Predicated region
    $region10: #{tpu_custom_call.1} parent=1 // pred_check
      _
    $region11: #{tpu_custom_call.1} parent=1 // pred_check_branch
      %25 = sbr.rel (0) target = $region13
    $region12: #{tpu_custom_call.1} parent=1 // pred_region
      %27 = dma.done [#allocation3], 256
    $region13: #{tpu_custom_call.1} parent=1 // pred_fallthru
      _
    %v28 = vld [vmem:[#allocation2] sm:$0x3]
    %v29 = vld [vmem:[#allocation2 + $0x2] sm:$0x3]
    %v30 = vld [vmem:[#allocation2 + $0x4] sm:$0x3]
    %v31 = vld [vmem:[#allocation2 + $0x6] sm:$0x3]
    %v32 = vld [vmem:[#allocation2 + $0x8] sm:$0x3]
    %v33 = vld [vmem:[#allocation2 + $0xa] sm:$0x3]
    %v34 = vld [vmem:[#allocation2 + $0xc] sm:$0x3]
    %v35 = vld [vmem:[#allocation2 + $0xe] sm:$0x3]
    %v36 = vld [vmem:[%s1] sm:$0xff]
    %v38 = vrot.slane %v36, 1
    %v39 = vrot.slane %v36, 2
    %v40 = vrot.slane %v36, 3
    %v41 = vrot.slane %v36, 4
    %v42 = vrot.slane %v36, 5
    %v43 = vrot.slane %v36, 6
    %v44 = vrot.slane %v36, 7
    %v45 = vperm.slane %v36, 0
    %v46 = vperm.slane %v38, 0
    %v47 = vperm.slane %v39, 0
    %v48 = vperm.slane %v40, 0
    %v49 = vperm.slane %v41, 0
    %v50 = vperm.slane %v42, 0
    %v51 = vperm.slane %v43, 0
    %v52 = vperm.slane %v44, 0
    %v61 = vadd.f32 %v28, %v45
    %v62 = vadd.f32 %v29, %v46
    %v63 = vadd.f32 %v30, %v47
    %v64 = vadd.f32 %v31, %v48
    %v65 = vadd.f32 %v32, %v49
    %v66 = vadd.f32 %v33, %v50
    %v67 = vadd.f32 %v34, %v51
    %v68 = vadd.f32 %v35, %v52
    %vm69 = vcmask 254976
    %70 = vst.msk [vmem:[#allocation5] sm:$0x3] %vm69, %v61
    %71 = vst.msk [vmem:[#allocation5 + $0x2] sm:$0x3] %vm69, %v62
    %72 = vst.msk [vmem:[#allocation5 + $0x4] sm:$0x3] %vm69, %v63
    %73 = vst.msk [vmem:[#allocation5 + $0x6] sm:$0x3] %vm69, %v64
    %74 = vst.msk [vmem:[#allocation5 + $0x8] sm:$0x3] %vm69, %v65
    %75 = vst.msk [vmem:[#allocation5 + $0xa] sm:$0x3] %vm69, %v66
    %76 = vst.msk [vmem:[#allocation5 + $0xc] sm:$0x3] %vm69, %v67
    %77 = vst.msk [vmem:[#allocation5 + $0xe] sm:$0x3] %vm69, %v68
    // Predicated region
    $region14: #{tpu_custom_call.1} parent=1 // pred_check
      _
    $region15: #{tpu_custom_call.1} parent=1 // pred_check_branch
      %79 = sbr.rel (0) target = $region17
    $region16: #{tpu_custom_call.1} parent=1 // pred_region
      %81 = vsyncadd [#allocation4], 0
      %s82 = sshll.u32 [#allocation5], 4
      %s83 = int_to_ptr.vmem [resolvable:$true] %s82
      %s84 = sshll.u32 %s2, 4
      %s85 = int_to_ptr.hbm [resolvable:$true] %s84
      %90 = dma.vmem_to_hbm [thread:$0]  %s83, 256, %s85, [#allocation4], 32, 32, 2
    $region17: #{tpu_custom_call.1} parent=1 // pred_fallthru
      _
    // Predicated region
    $region18: #{tpu_custom_call.1} parent=1 // pred_check
      _
    $region19: #{tpu_custom_call.1} parent=1 // pred_check_branch
      %92 = sbr.rel (0) target = $region21
    $region20: #{tpu_custom_call.1} parent=1 // pred_region
      %94 = dma.done [#allocation4], 256
    $region21: #{tpu_custom_call.1} parent=1 // pred_fallthru
      _
    %95 = vsyncpa [#allocation3], 1
    %96 = vsyncpa [#allocation4], 1

</llo_original>
